<compile_context>
chip_gen: v7x
topology: tpu7x:2x2x1
jax: 0.10.0
libtpu: 0.0.40
codegen_flags: <defaults>
</compile_context>

<pallas_src>
import jax
import jax.numpy as jnp
from jax.experimental import pallas as pl
from jax.experimental.pallas import tpu as pltpu

_VMEM_LIMIT_BYTES = 48 * 1024 * 1024    # fits v7x's 64 MiB physical VMEM w/ headroom
_TILE_THRESHOLD_BYTES = 32 * 1024 * 1024


# --------------------------------------------------------------------------- #
# Kernels
# --------------------------------------------------------------------------- #
def _la_fused_kernel(x0_ref, qk_ref, wv_ref, bv_ref, out_ref):
    """Single pass, full HW per batch element (x0 read from HBM exactly once).

    x0_ref : (1, C, HW) compute dtype    qk_ref : (1, 1, C) compute dtype
    wv_ref : (C, C)     compute dtype    bv_ref : (C, 1)    f32
    out_ref: (1, C, HW) x0 dtype
    """
    x0 = x0_ref[0]                                                        # (C, HW)
    # score row: (1,C) @ (C,HW) on the MXU, f32 accumulation.
    s = jnp.dot(qk_ref[0], x0, preferred_element_type=jnp.float32)        # (1, HW)
    s = s - jnp.max(s, axis=-1, keepdims=True)
    e = jnp.exp(s)
    p = e * pl.reciprocal(jnp.sum(e, axis=-1, keepdims=True), approx=True)
    # value path (gamma already folded into wv/bv by the wrapper).
    val = jnp.dot(wv_ref[...], x0, preferred_element_type=jnp.float32) + bv_ref[...]
    out_ref[0] = (val * p + x0.astype(jnp.float32)).astype(out_ref.dtype)


def _la_stats_kernel(x0_ref, qk_ref, m_ref, l_ref):
    """Tiled pass 1: online softmax max / denominator across HW tiles."""
    j = pl.program_id(1)

    @pl.when(j == 0)
    def _():
        m_ref[...] = jnp.full(m_ref.shape, -jnp.inf, m_ref.dtype)
        l_ref[...] = jnp.zeros(l_ref.shape, l_ref.dtype)

    s = jnp.dot(qk_ref[0], x0_ref[0], preferred_element_type=jnp.float32)  # (1, t)
    m_prev = m_ref[0]                                                      # (1, 1)
    m_new = jnp.maximum(m_prev, jnp.max(s, axis=-1, keepdims=True))
    l_ref[0] = (l_ref[0] * jnp.exp(m_prev - m_new)
                + jnp.sum(jnp.exp(s - m_new), axis=-1, keepdims=True))
    m_ref[0] = m_new


def _la_apply_kernel(x0_ref, qk_ref, m_ref, l_ref, wv_ref, bv_ref, out_ref):
    """Tiled pass 2: normalized score + value conv + residual, per HW tile."""
    x0 = x0_ref[0]                                                         # (C, t)
    s = jnp.dot(qk_ref[0], x0, preferred_element_type=jnp.float32)         # (1, t)
    p = jnp.exp(s - m_ref[0]) * pl.reciprocal(l_ref[0], approx=True)
    val = jnp.dot(wv_ref[...], x0, preferred_element_type=jnp.float32) + bv_ref[...]
    out_ref[0] = (val * p + x0.astype(jnp.float32)).astype(out_ref.dtype)


# --------------------------------------------------------------------------- #
# Wrapper
# --------------------------------------------------------------------------- #
def _pick_hw_tile(hw, c, itemsize, budget_bytes):
    """Largest multiple-of-128 divisor of hw whose per-step working set fits."""
    per_px = c * (4 * itemsize + 12)    # double-buffered in+out + f32 temporaries
    cap = max(128, budget_bytes // per_px)
    best = None
    t = 128
    while t <= min(hw, cap):
        if hw % t == 0:
            best = t
        t += 128
    return best


def la_conv(x0, x1, params, *, hw_tile=None,
            tile_threshold_bytes=_TILE_THRESHOLD_BYTES):
    """LA_conv forward.

    x0: (B, 64, H, W) feature map.  Its dtype sets the heavy-path storage/matmul
        dtype (pass bf16 to halve HBM traffic); accumulation/softmax are f32.
    x1: (B, 256) degradation representation.
    params = (wq (64,256), bq (64,), wk (64,64), bk (64,), wv (64,64), bv (64,),
              gamma scalar), all in the PyTorch orientation.
    Returns (B, 64, H, W) in x0.dtype.
    """
    wq, bq, wk, bk, wv, bv, gamma = params   # bk drops out (softmax-invariant)
    b, c, h, w = x0.shape
    hw = h * w
    cdt = x0.dtype
    f32 = jnp.float32

    # ---- tiny per-batch preamble: O(B*(256*64 + 64*64)) FLOPs, plain JAX -----
    q = x1.astype(f32) @ wq.T.astype(f32) + bq.astype(f32)           # (B, 64)
    # Fold query into the key weights: score = (q @ Wk) @ x0 (+ q.bk, a per-batch
    # constant the softmax ignores).
    qk = (q @ wk.astype(f32)).astype(cdt).reshape(b, 1, c)           # (B, 1, C)
    gamma_f = jnp.asarray(gamma, dtype=f32).reshape(())
    wv_s = (gamma_f * wv.astype(f32)).astype(cdt)                    # (C, C)
    bv_s = (gamma_f * bv.astype(f32)).reshape(c, 1)                  # (C, 1), f32

    # NCHW flattened *is* [B, C, HW]: pure reshape, no transpose, pixels on lanes.
    x0c = x0.reshape(b, c, hw)

    itemsize = jnp.dtype(cdt).itemsize
    est_single_pass = c * hw * (4 * itemsize + 12) + (2 << 20)

    t_hw = None
    if hw_tile is not None:
        t_hw = int(hw_tile)
        if t_hw % 128 != 0:
            raise ValueError("hw_tile must be a multiple of 128")
    elif est_single_pass > tile_threshold_bytes:
        # TODO(synk): HW that is not a multiple of 128 currently falls back to the
        # single full-HW block; add lane masking to tile arbitrary HW.
        t_hw = _pick_hw_tile(hw, c, itemsize, tile_threshold_bytes)

    def _cparams(sem):
        return pltpu.CompilerParams(dimension_semantics=sem,
                                    vmem_limit_bytes=_VMEM_LIMIT_BYTES)

    if t_hw is not None and t_hw < hw and hw % t_hw == 0:
        nt = hw // t_hw
        # ---- pass 1: online softmax statistics over HW tiles ------------------
        m_all, l_all = pl.pallas_call(
            _la_stats_kernel,
            out_shape=(jax.ShapeDtypeStruct((b, 1, 1), f32),
                       jax.ShapeDtypeStruct((b, 1, 1), f32)),
            grid_spec=pltpu.PrefetchScalarGridSpec(
                num_scalar_prefetch=0,
                grid=(b, nt),
                in_specs=[
                    pl.BlockSpec((1, c, t_hw), lambda i, j: (i, 0, j)),   # x0
                    pl.BlockSpec((1, 1, c), lambda i, j: (i, 0, 0)),      # qk
                ],
                out_specs=[
                    pl.BlockSpec((1, 1, 1), lambda i, j: (i, 0, 0)),      # m
                    pl.BlockSpec((1, 1, 1), lambda i, j: (i, 0, 0)),      # l
                ]),
            compiler_params=_cparams(("parallel", "arbitrary")),
        )(x0c, qk)
        # ---- pass 2: normalized attention + value conv + residual -------------
        out = pl.pallas_call(
            _la_apply_kernel,
            out_shape=jax.ShapeDtypeStruct((b, c, hw), cdt),
            grid_spec=pltpu.PrefetchScalarGridSpec(
                num_scalar_prefetch=0,
                grid=(b, nt),
                in_specs=[
                    pl.BlockSpec((1, c, t_hw), lambda i, j: (i, 0, j)),   # x0
                    pl.BlockSpec((1, 1, c), lambda i, j: (i, 0, 0)),      # qk
                    pl.BlockSpec((1, 1, 1), lambda i, j: (i, 0, 0)),      # m
                    pl.BlockSpec((1, 1, 1), lambda i, j: (i, 0, 0)),      # l
                    pl.BlockSpec((c, c), lambda i, j: (0, 0)),            # Wv'
                    pl.BlockSpec((c, 1), lambda i, j: (0, 0)),            # bv'
                ],
                out_specs=pl.BlockSpec((1, c, t_hw), lambda i, j: (i, 0, j))),
            compiler_params=_cparams(("parallel", "parallel")),
        )(x0c, qk, m_all, l_all, wv_s, bv_s)
    else:
        out = pl.pallas_call(
            _la_fused_kernel,
            out_shape=jax.ShapeDtypeStruct((b, c, hw), cdt),
            grid_spec=pltpu.PrefetchScalarGridSpec(
                num_scalar_prefetch=0,
                grid=(b,),
                in_specs=[
                    pl.BlockSpec((1, c, hw), lambda i: (i, 0, 0)),        # x0
                    pl.BlockSpec((1, 1, c), lambda i: (i, 0, 0)),         # qk
                    pl.BlockSpec((c, c), lambda i: (0, 0)),               # Wv'
                    pl.BlockSpec((c, 1), lambda i: (0, 0)),               # bv'
                ],
                out_specs=pl.BlockSpec((1, c, hw), lambda i: (i, 0, 0))),
            compiler_params=_cparams(("parallel",)),
        )(x0c, qk, wv_s, bv_s)

    return out.reshape(b, c, h, w)


# --------------------------------------------------------------------------- #
# Plain-JAX reference (mirrors the PyTorch forward, no folds)
# --------------------------------------------------------------------------- #
def la_conv_ref(x0, x1, params):
    wq, bq, wk, bk, wv, bv, gamma = params
    b, c, h, w = x0.shape
    x0f = x0.astype(jnp.float32).reshape(b, c, h * w)
    q = x1.astype(jnp.float32) @ wq.T + bq                         # (B, 64)
    key = jnp.einsum('oi,bip->bop', wk, x0f) + bk[None, :, None]   # (B, 64, HW)
    score = jnp.einsum('bo,bop->bp', q, key)                       # (B, HW)
    score = jax.nn.softmax(score, axis=-1)
    val = jnp.einsum('oi,bip->bop', wv, x0f) + bv[None, :, None]
    out = gamma * (val * score[:, None, :]) + x0f
    return out.reshape(b, c, h, w)


if __name__ == "__main__":
    key = jax.random.PRNGKey(0)
    ks = jax.random.split(key, 8)

    B, C, H, W = 2, 64, 16, 16    # module fixes C=64 channels, 256-d degradation
    DEG = 256

    x0 = jax.random.normal(ks[0], (B, C, H, W), jnp.float32)
    x1 = jax.random.normal(ks[1], (B, DEG), jnp.float32)
    # x[2] of the PyTorch module is unused by forward(); omitted here.

    wq = jax.random.normal(ks[2], (64, DEG), jnp.float32) * 0.05   # Linear (out,in)
    bq = jax.random.normal(ks[3], (64,), jnp.float32) * 0.05
    wk = jax.random.normal(ks[4], (64, 64), jnp.float32) * 0.05    # Conv 1x1 (out,in)
    bk = jax.random.normal(ks[5], (64,), jnp.float32) * 0.05
    wv = jax.random.normal(ks[6], (64, 64), jnp.float32) * 0.05
    bv = jax.random.normal(ks[7], (64,), jnp.float32) * 0.05
    # PyTorch inits gamma to 0 (output would trivially equal x[0]); use a nonzero
    # value so the attention path is actually exercised.
    gamma = jnp.asarray(0.5, jnp.float32)
    params = (wq, bq, wk, bk, wv, bv, gamma)

    run = jax.jit(la_conv, static_argnames=("hw_tile",))
    ref = la_conv_ref(x0, x1, params)

    # 1) f32, single fused pass (x0 read from HBM exactly once).  Tolerance
    #    accounts for TPU default matmul precision + the query-fold reassociation.
    out_f32 = jax.block_until_ready(run(x0, x1, params))
    assert out_f32.shape == (B, C, H, W)
    assert jnp.allclose(out_f32, ref, atol=1e-2, rtol=1e-2), "f32 fused mismatch"

    # 2) f32, forced HW tiling: exercises the two-pass online-softmax path used
    #    for large feature maps (v7x VMEM).  Must agree tightly with the fused path.
    out_tiled = jax.block_until_ready(run(x0, x1, params, hw_tile=128))
    assert jnp.allclose(out_tiled, out_f32, atol=1e-4, rtol=1e-4), "tiled path mismatch"
    assert jnp.allclose(out_tiled, ref, atol=1e-2, rtol=1e-2), "tiled vs ref mismatch"

    # 3) bf16 activations: halves HBM traffic of the dominant x0 stream; matmuls
    #    accumulate in f32 and softmax / residual stay f32.
    out_bf16 = jax.block_until_ready(run(x0.astype(jnp.bfloat16), x1, params))
    assert out_bf16.dtype == jnp.bfloat16
    assert jnp.allclose(out_bf16.astype(jnp.float32), ref, atol=1e-1, rtol=5e-2), \
        "bf16 mismatch"

    print("KERNEL_OK")
</pallas_src>

<mosaic_0001>
module attributes {stable_mosaic.version = 11 : i64} {
  func.func @_la_fused_kernel(%arg0: i32, %arg1: memref<1x64x256xf32, #tpu.memory_space<vmem>>, %arg2: memref<1x1x64xf32, #tpu.memory_space<vmem>>, %arg3: memref<64x64xf32, #tpu.memory_space<vmem>>, %arg4: memref<64x1xf32, #tpu.memory_space<vmem>>, %arg5: memref<1x64x256xf32, #tpu.memory_space<vmem>>) attributes {dimension_semantics = [#tpu.dimension_semantics<parallel>], iteration_bounds = array<i64: 2>, scalar_prefetch = 0 : i64, scratch_operands = 0 : i64, tpu.core_type = #tpu.core_type<tc>, window_params = [{transform_indices = @transform_0, window_bounds = array<i64: 1, 64, 256>}, {transform_indices = @transform_1, window_bounds = array<i64: 1, 1, 64>}, {pipeline_mode = #tpu.pipeline_mode<synchronous>, transform_indices = @transform_2, window_bounds = array<i64: 64, 64>}, {pipeline_mode = #tpu.pipeline_mode<synchronous>, transform_indices = @transform_3, window_bounds = array<i64: 64, 1>}, {transform_indices = @transform_4, window_bounds = array<i64: 1, 64, 256>}]} {
    %c0 = arith.constant 0 : index
    %c0_0 = arith.constant 0 : index
    %c0_1 = arith.constant 0 : index
    %0 = vector.load %arg1[%c0, %c0_0, %c0_1] : memref<1x64x256xf32, #tpu.memory_space<vmem>>, vector<1x64x256xf32>
    %1 = vector.shape_cast %0 : vector<1x64x256xf32> to vector<64x256xf32>
    %c0_2 = arith.constant 0 : index
    %c0_3 = arith.constant 0 : index
    %c0_4 = arith.constant 0 : index
    %2 = vector.load %arg2[%c0_2, %c0_3, %c0_4] : memref<1x1x64xf32, #tpu.memory_space<vmem>>, vector<1x1x64xf32>
    %3 = vector.shape_cast %2 : vector<1x1x64xf32> to vector<1x64xf32>
    %cst = arith.constant dense<0.000000e+00> : vector<1x256xf32>
    %4 = tpu.matmul %3, %1, %cst {dimension_numbers = #tpu.dot_dimension_numbers<[1], [0], [0], [1], [0, 0, 1, 1], [], []>} : vector<1x64xf32>, vector<64x256xf32>, vector<1x256xf32> -> vector<1x256xf32>
    %cst_5 = arith.constant dense<0xFF800000> : vector<1xf32>
    %5 = vector.multi_reduction <maximumf>, %4, %cst_5 [1] : vector<1x256xf32> to vector<1xf32>
    %6 = vector.shape_cast %5 : vector<1xf32> to vector<1x1xf32>
    %7 = vector.broadcast %6 : vector<1x1xf32> to vector<1x256xf32>
    %8 = arith.subf %4, %7 : vector<1x256xf32>
    %9 = math.exp %8 : vector<1x256xf32>
    %cst_6 = arith.constant dense<0.000000e+00> : vector<1xf32>
    %10 = vector.multi_reduction <add>, %9, %cst_6 [1] : vector<1x256xf32> to vector<1xf32>
    %11 = vector.shape_cast %10 : vector<1xf32> to vector<1x1xf32>
    %12 = tpu.reciprocal %11 {approx = true} : vector<1x1xf32> -> vector<1x1xf32>
    %13 = vector.broadcast %12 : vector<1x1xf32> to vector<1x256xf32>
    %14 = arith.mulf %9, %13 : vector<1x256xf32>
    %c0_7 = arith.constant 0 : index
    %c0_8 = arith.constant 0 : index
    %15 = vector.load %arg3[%c0_7, %c0_8] : memref<64x64xf32, #tpu.memory_space<vmem>>, vector<64x64xf32>
    %cst_9 = arith.constant dense<0.000000e+00> : vector<64x256xf32>
    %16 = tpu.matmul %15, %1, %cst_9 {dimension_numbers = #tpu.dot_dimension_numbers<[1], [0], [0], [1], [0, 0, 1, 1], [], []>} : vector<64x64xf32>, vector<64x256xf32>, vector<64x256xf32> -> vector<64x256xf32>
    %c0_10 = arith.constant 0 : index
    %c0_11 = arith.constant 0 : index
    %17 = vector.load %arg4[%c0_10, %c0_11] : memref<64x1xf32, #tpu.memory_space<vmem>>, vector<64x1xf32>
    %18 = vector.broadcast %17 : vector<64x1xf32> to vector<64x256xf32>
    %19 = arith.addf %16, %18 : vector<64x256xf32>
    %20 = vector.broadcast %14 : vector<1x256xf32> to vector<64x256xf32>
    %21 = arith.mulf %19, %20 : vector<64x256xf32>
    %22 = arith.addf %21, %1 : vector<64x256xf32>
    %c0_12 = arith.constant 0 : index
    %c0_13 = arith.constant 0 : index
    %c0_14 = arith.constant 0 : index
    %23 = vector.load %arg5[%c0_12, %c0_13, %c0_14] : memref<1x64x256xf32, #tpu.memory_space<vmem>>, vector<1x64x256xf32>
    %24 = vector.shape_cast %23 : vector<1x64x256xf32> to vector<64x256xf32>
    %25 = vector.shape_cast %22 : vector<64x256xf32> to vector<1x64x256xf32>
    tpu.vector_store %arg5[%c0_12, %c0_13, %c0_14], %25 {strides = array<i32>} : memref<1x64x256xf32, #tpu.memory_space<vmem>>, vector<1x64x256xf32>,
    return
  }
  func.func @transform_0(%arg0: i32) -> (i32, i32, i32) {
    %c0_i32 = arith.constant 0 : i32
    %c0_i32_0 = arith.constant 0 : i32
    %c0_i32_1 = arith.constant 0 : i32
    return %arg0, %c0_i32, %c0_i32_0 : i32, i32, i32
  }
  func.func @transform_1(%arg0: i32) -> (i32, i32, i32) {
    %c0_i32 = arith.constant 0 : i32
    %c0_i32_0 = arith.constant 0 : i32
    %c0_i32_1 = arith.constant 0 : i32
    return %arg0, %c0_i32, %c0_i32_0 : i32, i32, i32
  }
  func.func @transform_2(%arg0: i32) -> (i32, i32) {
    %c0_i32 = arith.constant 0 : i32
    %c0_i32_0 = arith.constant 0 : i32
    %c0_i32_1 = arith.constant 0 : i32
    return %c0_i32, %c0_i32_0 : i32, i32
  }
  func.func @transform_3(%arg0: i32) -> (i32, i32) {
    %c0_i32 = arith.constant 0 : i32
    %c0_i32_0 = arith.constant 0 : i32
    %c0_i32_1 = arith.constant 0 : i32
    return %c0_i32, %c0_i32_0 : i32, i32
  }
  func.func @transform_4(%arg0: i32) -> (i32, i32, i32) {
    %c0_i32 = arith.constant 0 : i32
    %c0_i32_0 = arith.constant 0 : i32
    %c0_i32_1 = arith.constant 0 : i32
    return %arg0, %c0_i32, %c0_i32_0 : i32, i32, i32
  }
}

</mosaic_0001>

<llo_original>
// kernel: la_conv.1
$region0: #{la_conv.1}
  #allocation0 [shape = 'u32[]', space=smem, size = 0x4, offset = 0x4, fixed_abs, tag = 'smem constant byte address 0x4 - core index']
  #allocation1 [shape = 'u32[144,128]{1,0:T(1,128)}', space=vmem, size = 0x12000, scoped, tag = 'internal scratch']
  %s0 = inlined_call_operand.vmem [shape: f32[2,64,256], index: 0, kind: input, shape index: {}]
  %s1 = inlined_call_operand.vmem [shape: f32[2,1,64], index: 1, kind: input, shape index: {}]
  %s2 = inlined_call_operand.vmem [shape: f32[64,64], index: 2, kind: input, shape index: {}]
  %s3 = inlined_call_operand.vmem [shape: f32[64,1], index: 3, kind: input, shape index: {}]
  %s4 = inlined_call_operand.vmem [shape: f32[2,64,256], index: 4, kind: output, shape index: {}]
  %s5 = sld [smem:[#allocation0]]
  $region49: #{la_conv.1} parent=0
    _
  %s7 = ssub.s32 1, %s5
  %s8 = scalar_select 0, %s7, %s5
  loop: start=0, step=1, limit=4
  $region2: #{la_conv.1} parent=0 // loop_pre_header
    _
  $region3: #{la_conv.1} parent=0 // loop_header
    %s10 = sphi 0, %s14
    %p11 = scmp.ge.s32.totalorder %s10, 4
    %s20 = sphi 0, %s22
    %s23 = sphi 0, %s20
    %s24 = sphi 0, %s23
    %s40 = sphi 0, %s24
    %s46 = sphi 0, %s48
    %s49 = sphi 0, %s46
    %s50 = sphi 0, %s49
    %s66 = sphi 0, %s50
    %s70 = sphi 0, %s70
    %s72 = sphi 0, %s70
    %s73 = sphi 0, %s72
    %s87 = sphi 0, %s73
    %s91 = sphi 0, %s91
    %s93 = sphi 0, %s91
    %s94 = sphi 0, %s93
    %s108 = sphi 0, %s94
    %s114 = sphi 0, %s116
    %s117 = sphi 0, %s114
    %s118 = sphi 0, %s117
    %s134 = sphi 0, %s118
  $region4: #{la_conv.1} parent=0 // loop_header_branch
    %13 = sbr.rel (%p11) target = $region8
  $region5: #{la_conv.1} parent=0 // loop_body
    %s15 = ssub.s32 %s10, 1
    %s16 = ssub.s32 %s10, 2
    %s17 = sadd.s32 %s10, 1
    %s18 = ssub.s32 %s10, %s17
    %p19 = scmp.eq.s32.totalorder %s18, 0
    %s21 = sadd.s32 %s20, 1
    %s22 = scalar_select %p19, %s20, %s21
    %p25 = pneg %p19
    %p26 = scmp.eq.s32.totalorder %s10, 1
    %p27 = por %p25, %p26
    %p28 = scmp.ne.s32.totalorder %s20, %s23
    %p29 = scmp.eq.s32.totalorder %s10, 0
    %p30 = por %p28, %p29
    %p31 = scmp.ne.s32.totalorder %s20, %s23
    %p32 = scmp.eq.s32.totalorder %s15, 1
    %p33 = por %p31, %p32
    %p34 = scmp.ne.s32.totalorder %s23, %s24
    %p35 = scmp.eq.s32.totalorder %s15, 0
    %p36 = por %p34, %p35
    %p37 = scmp.ne.s32.totalorder %s23, %s24
    %p38 = scmp.eq.s32.totalorder %s16, 1
    %p39 = por %p37, %p38
    %p41 = scmp.ne.s32.totalorder %s24, %s40
    %p42 = scmp.eq.s32.totalorder %s16, 0
    %p43 = por %p41, %p42
    %s44 = ssub.s32 %s10, %s17
    %p45 = scmp.eq.s32.totalorder %s44, 0
    %s47 = sadd.s32 %s46, 1
    %s48 = scalar_select %p45, %s46, %s47
    %p51 = pneg %p45
    %p52 = scmp.eq.s32.totalorder %s10, 1
    %p53 = por %p51, %p52
    %p54 = scmp.ne.s32.totalorder %s46, %s49
    %p55 = scmp.eq.s32.totalorder %s10, 0
    %p56 = por %p54, %p55
    %p57 = scmp.ne.s32.totalorder %s46, %s49
    %p58 = scmp.eq.s32.totalorder %s15, 1
    %p59 = por %p57, %p58
    %p60 = scmp.ne.s32.totalorder %s49, %s50
    %p61 = scmp.eq.s32.totalorder %s15, 0
    %p62 = por %p60, %p61
    %p63 = scmp.ne.s32.totalorder %s49, %s50
    %p64 = scmp.eq.s32.totalorder %s16, 1
    %p65 = por %p63, %p64
    %p67 = scmp.ne.s32.totalorder %s50, %s66
    %p68 = scmp.eq.s32.totalorder %s16, 0
    %p69 = por %p67, %p68
    %s71 = sadd.s32 %s70, 1
    %p74 = scmp.eq.s32.totalorder %s10, 1
    %p75 = scmp.ne.s32.totalorder %s70, %s72
    %p76 = scmp.eq.s32.totalorder %s10, 0
    %p77 = por %p75, %p76
    %p78 = scmp.ne.s32.totalorder %s70, %s72
    %p79 = scmp.eq.s32.totalorder %s15, 1
    %p80 = por %p78, %p79
    %p81 = scmp.ne.s32.totalorder %s72, %s73
    %p82 = scmp.eq.s32.totalorder %s15, 0
    %p83 = por %p81, %p82
    %p84 = scmp.ne.s32.totalorder %s72, %s73
    %p85 = scmp.eq.s32.totalorder %s16, 1
    %p86 = por %p84, %p85
    %p88 = scmp.ne.s32.totalorder %s73, %s87
    %p89 = scmp.eq.s32.totalorder %s16, 0
    %p90 = por %p88, %p89
    %s92 = sadd.s32 %s91, 1
    %p95 = scmp.eq.s32.totalorder %s10, 1
    %p96 = scmp.ne.s32.totalorder %s91, %s93
    %p97 = scmp.eq.s32.totalorder %s10, 0
    %p98 = por %p96, %p97
    %p99 = scmp.ne.s32.totalorder %s91, %s93
    %p100 = scmp.eq.s32.totalorder %s15, 1
    %p101 = por %p99, %p100
    %p102 = scmp.ne.s32.totalorder %s93, %s94
    %p103 = scmp.eq.s32.totalorder %s15, 0
    %p104 = por %p102, %p103
    %p105 = scmp.ne.s32.totalorder %s93, %s94
    %p106 = scmp.eq.s32.totalorder %s16, 1
    %p107 = por %p105, %p106
    %p109 = scmp.ne.s32.totalorder %s94, %s108
    %p110 = scmp.eq.s32.totalorder %s16, 0
    %p111 = por %p109, %p110
    %s112 = ssub.s32 %s10, %s17
    %p113 = scmp.eq.s32.totalorder %s112, 0
    %s115 = sadd.s32 %s114, 1
    %s116 = scalar_select %p113, %s114, %s115
    %p119 = pneg %p113
    %p120 = scmp.eq.s32.totalorder %s10, 1
    %p121 = por %p119, %p120
    %p122 = scmp.ne.s32.totalorder %s114, %s117
    %p123 = scmp.eq.s32.totalorder %s10, 0
    %p124 = por %p122, %p123
    %p125 = scmp.ne.s32.totalorder %s114, %s117
    %p126 = scmp.eq.s32.totalorder %s15, 1
    %p127 = por %p125, %p126
    %p128 = scmp.ne.s32.totalorder %s117, %s118
    %p129 = scmp.eq.s32.totalorder %s15, 0
    %p130 = por %p128, %p129
    %p131 = scmp.ne.s32.totalorder %s117, %s118
    %p132 = scmp.eq.s32.totalorder %s16, 1
    %p133 = por %p131, %p132
    %p135 = scmp.ne.s32.totalorder %s118, %s134
    %p136 = scmp.eq.s32.totalorder %s16, 0
    %p137 = por %p135, %p136
    %p138 = scmp.le.s32.totalorder 1, %s10
    %p139 = scmp.lt.s32.totalorder %s10, 3
    %p140 = pnand %p138, %p139
    %p141 = pneg %p140
    // Predicated region
    $region9: #{la_conv.1} parent=5 // pred_check
      _
    $region10: #{la_conv.1} parent=5 // pred_check_branch
      %143 = sbr.rel (%p140) target = $region12
    $region11: #{la_conv.1} parent=5 // pred_region
      %s144 = ssub.s32 %s10, 1
      // Predicated region
      $region13: #{la_conv.1} parent=11 // pred_check
        %p145 = pneg %p83
      $region14: #{la_conv.1} parent=11 // pred_check_branch
        %147 = sbr.rel (%p145) target = $region16
      $region15: #{la_conv.1} parent=11 // pred_region
        _
      $region16: #{la_conv.1} parent=11 // pred_fallthru
        _
      // Predicated region
      $region17: #{la_conv.1} parent=11 // pred_check
        %p148 = pneg %p104
      $region18: #{la_conv.1} parent=11 // pred_check_branch
        %150 = sbr.rel (%p148) target = $region20
      $region19: #{la_conv.1} parent=11 // pred_region
        _
      $region20: #{la_conv.1} parent=11 // pred_fallthru
        _
    $region12: #{la_conv.1} parent=5 // pred_fallthru
      _
    %p151 = scmp.lt.s32.totalorder %s10, 2
    // Predicated region
    $region21: #{la_conv.1} parent=5 // pred_check
      %p152 = pneg %p151
    $region22: #{la_conv.1} parent=5 // pred_check_branch
      %154 = sbr.rel (%p152) target = $region24
    $region23: #{la_conv.1} parent=5 // pred_region
      // Predicated region
      $region25: #{la_conv.1} parent=23 // pred_check
        %p155 = pneg %p30
      $region26: #{la_conv.1} parent=23 // pred_check_branch
        %157 = sbr.rel (%p155) target = $region28
      $region27: #{la_conv.1} parent=23 // pred_region
        %p158 = scmp.lt.s32.totalorder %s10, 1
        %s159 = scalar_select %p158, %s10, 1
        %s160 = smul.addr %s159, 16
        %s161 = smul.addr %s160, 8
        %s162 = scalar_lea.vmem %s0, %s161
      $region28: #{la_conv.1} parent=23 // pred_fallthru
        _
      // Predicated region
      $region29: #{la_conv.1} parent=23 // pred_check
        %p163 = pneg %p56
      $region30: #{la_conv.1} parent=23 // pred_check_branch
        %165 = sbr.rel (%p163) target = $region32
      $region31: #{la_conv.1} parent=23 // pred_region
        %p166 = scmp.lt.s32.totalorder %s10, 1
        %s167 = scalar_select %p166, %s10, 1
        %s168 = scalar_lea.vmem %s1, %s167
      $region32: #{la_conv.1} parent=23 // pred_fallthru
        _
    $region24: #{la_conv.1} parent=5 // pred_fallthru
      _
    %p169 = scmp.le.s32.totalorder 1, %s10
    %p170 = scmp.lt.s32.totalorder %s10, 3
    %p171 = pnand %p169, %p170
    %p172 = pneg %p171
    // Predicated region
    $region33: #{la_conv.1} parent=5 // pred_check
      _
    $region34: #{la_conv.1} parent=5 // pred_check_branch
      %174 = sbr.rel (%p171) target = $region36
    $region35: #{la_conv.1} parent=5 // pred_region
      %s175 = ssub.s32 %s10, 1
      %p176 = scmp.lt.s32.totalorder %s15, 1
      %s177 = scalar_select %p176, %s15, 1
      %s178 = smul.addr %s177, 16
      %s179 = smul.addr %s178, 8
      %s180 = scalar_lea.vmem %s0, %s179
      %p181 = pneg %p36
      %p182 = pneg %p33
      %p183 = scmp.lt.s32.totalorder %s15, 1
      %s184 = scalar_select %p183, %s15, 1
      %s185 = scalar_lea.vmem %s1, %s184
      %p186 = pneg %p62
      %p187 = pneg %p59
      %p188 = pneg %p83
      %p189 = pneg %p80
      %p190 = pneg %p104
      %p191 = pneg %p101
      %p192 = pneg %p130
      %p193 = pneg %p127
      %p194 = scmp.lt.s32.totalorder %s15, 1
      %s195 = scalar_select %p194, %s15, 1
      %s196 = smul.addr %s195, 16
      %s197 = smul.addr %s196, 8
      %s198 = scalar_lea.vmem %s4, %s197
      %p199 = scmp.lt.s32.totalorder %s15, 1
      %s200 = scalar_select %p199, %s15, 1
      %s201 = smul.addr %s200, 16
      %s202 = smul.addr %s201, 8
      %s203 = scalar_lea.vmem %s0, %s202
      %p204 = scmp.lt.s32.totalorder %s15, 1
      %s205 = scalar_select %p204, %s15, 1
      %s206 = scalar_lea.vmem %s1, %s205
      %p207 = scmp.lt.s32.totalorder %s15, 1
      %s208 = scalar_select %p207, %s15, 1
      %s209 = smul.addr %s208, 16
      %s210 = smul.addr %s209, 8
      %s211 = scalar_lea.vmem %s4, %s210
      %v212 = vld [vmem:[%s203] sm:$0xff]
      %v213 = vld [vmem:[%s203 + $0x8] sm:$0xff]
      %v214 = vld [vmem:[%s203 + $0x10] sm:$0xff]
      %v215 = vld [vmem:[%s203 + $0x18] sm:$0xff]
      %v216 = vld [vmem:[%s203 + $0x20] sm:$0xff]
      %v217 = vld [vmem:[%s203 + $0x28] sm:$0xff]
      %v218 = vld [vmem:[%s203 + $0x30] sm:$0xff]
      %v219 = vld [vmem:[%s203 + $0x38] sm:$0xff]
      %v220 = vld [vmem:[%s203 + $0x40] sm:$0xff]
      %v221 = vld [vmem:[%s203 + $0x48] sm:$0xff]
      %v222 = vld [vmem:[%s203 + $0x50] sm:$0xff]
      %v223 = vld [vmem:[%s203 + $0x58] sm:$0xff]
      %v224 = vld [vmem:[%s203 + $0x60] sm:$0xff]
      %v225 = vld [vmem:[%s203 + $0x68] sm:$0xff]
      %v226 = vld [vmem:[%s203 + $0x70] sm:$0xff]
      %v227 = vld [vmem:[%s203 + $0x78] sm:$0xff]
      %v228 = vld [vmem:[%s206] sm:$0x1]
      %vm229 = vcmask 523264
      %v231 = vsel %vm229, %v228, 0
      %233 = vmatprep.subr.mxu0 %v213
      %234 = vmatpush1.msra.mxu0 %v212
      %235 = vmatprep.subr.mxu0 %v215
      %236 = vmatpush1.msra.mxu0 %v214
      %237 = vmatprep.subr.mxu0 %v217
      %238 = vmatpush1.msra.mxu0 %v216
      %239 = vmatprep.subr.mxu0 %v219
      %240 = vmatpush1.msra.mxu0 %v218
      %241 = vmatprep.subr.mxu0 %v221
      %242 = vmatpush1.msra.mxu0 %v220
      %243 = vmatprep.subr.mxu0 %v223
      %244 = vmatpush1.msra.mxu0 %v222
      %245 = vmatprep.subr.mxu0 %v225
      %246 = vmatpush1.msra.mxu0 %v224
      %247 = vmatprep.subr.mxu0 %v227
      %248 = vmatpush1.msra.mxu0 %v226
      %249 = vmatprep.subr.mxu0 0.0
      %250 = vmatpush1.msra.mxu0 0.0
      %251 = vmatprep.subr.mxu0 0.0
      %252 = vmatpush1.msra.mxu0 0.0
      %253 = vmatprep.subr.mxu0 0.0
      %254 = vmatpush1.msra.mxu0 0.0
      %255 = vmatprep.subr.mxu0 0.0
      %256 = vmatpush1.msra.mxu0 0.0
      %257 = vmatprep.subr.mxu0 0.0
      %258 = vmatpush1.msra.mxu0 0.0
      %259 = vmatprep.subr.mxu0 0.0
      %260 = vmatpush1.msra.mxu0 0.0
      %261 = vmatprep.subr.mxu0 0.0
      %262 = vmatpush1.msra.mxu0 0.0
      %263 = vmatprep.subr.mxu0 0.0
      %264 = vmatpush1.msra.mxu0 0.0
      %265 = vmatprep.subr.mxu0 0.0
      %266 = vmatpush1.msra.mxu0 0.0
      %267 = vmatprep.subr.mxu0 0.0
      %268 = vmatpush1.msra.mxu0 0.0
      %269 = vmatprep.subr.mxu0 0.0
      %270 = vmatpush1.msra.mxu0 0.0
      %271 = vmatprep.subr.mxu0 0.0
      %272 = vmatpush1.msra.mxu0 0.0
      %273 = vmatprep.subr.mxu0 0.0
      %274 = vmatpush1.msra.mxu0 0.0
      %275 = vmatprep.subr.mxu0 0.0
      %276 = vmatpush1.msra.mxu0 0.0
      %277 = vmatprep.subr.mxu0 0.0
      %278 = vmatpush1.msra.mxu0 0.0
      %279 = vmatprep.subr.mxu0 0.0
      %280 = vmatpush1.msra.mxu0 0.0
      %281 = vmatprep.subr.mxu0 0.0
      %282 = vmatpush1.msra.mxu0 0.0
      %283 = vmatprep.subr.mxu0 0.0
      %284 = vmatpush1.msra.mxu0 0.0
      %285 = vmatprep.subr.mxu0 0.0
      %286 = vmatpush1.msra.mxu0 0.0
      %287 = vmatprep.subr.mxu0 0.0
      %288 = vmatpush1.msra.mxu0 0.0
      %289 = vmatprep.subr.mxu0 0.0
      %290 = vmatpush1.msra.mxu0 0.0
      %291 = vmatprep.subr.mxu0 0.0
      %292 = vmatpush1.msra.mxu0 0.0
      %293 = vmatprep.subr.mxu0 0.0
      %294 = vmatpush1.msra.mxu0 0.0
      %295 = vmatprep.subr.mxu0 0.0
      %296 = vmatpush1.msra.mxu0 0.0
      %297 = vmatprep.mubr.f32.mxu0 0.0
      %298 = vmatmul.mubr.f32.gmra.mrb[0].mxu0 %v231
      %v299 = vpop.f32.mrb[0].mxu0
      %v300 = vadd.f32 0.0, %v299
      %v301 = vpop.f32.mrb[0].mxu0
      %v302 = vadd.f32 0.0, %v301
      %303 = vdwg.mxu0
      %vm304 = vcmask 1040384
      %v305 = vsel %vm304, %v300, -inf
      %v306 = vsel %vm304, %v302, -inf
      %v307 = vmax.f32 %v305, %v306
      %308 = vmax.xlane.f32.xlu0 %v307
      %v309 = vpop.xlane.xlu0 %308
      %v310 = vsub.f32 %v300, %v309
      %v311 = vsub.f32 %v302, %v309
      %v312 = vmul.f32 %v310, 1.442695
      %v313 = vpow.pop %v312
      %v314 = vmul.f32 %v311, 1.442695
      %v315 = vpow.pop %v314
      %v316 = vsel %vm304, %v313, 0.0
      %v317 = vsel %vm304, %v315, 0.0
      %v318 = vadd.f32 %v316, %v317
      %319 = vadd.xlane.f32.xlu0 %v318
      %v320 = vpop.xlane.xlu0 %319
      %v321 = vrcp.pop %v320
      %v322 = vmul.f32 %v313, %v321
      %v323 = vmul.f32 %v315, %v321
      %v324 = vld [vmem:[%s2] sm:$0xff]
      %v325 = vld [vmem:[%s2 + $0x8] sm:$0xff]
      %v326 = vld [vmem:[%s2 + $0x10] sm:$0xff]
      %v327 = vld [vmem:[%s2 + $0x18] sm:$0xff]
      %v328 = vld [vmem:[%s2 + $0x20] sm:$0xff]
      %v329 = vld [vmem:[%s2 + $0x28] sm:$0xff]
      %v330 = vld [vmem:[%s2 + $0x30] sm:$0xff]
      %v331 = vld [vmem:[%s2 + $0x38] sm:$0xff]
      %v332 = vld [vmem:[%s3] sm:$0xff]
      %v333 = vld [vmem:[%s3 + $0x8] sm:$0xff]
      %v334 = vld [vmem:[%s3 + $0x10] sm:$0xff]
      %v335 = vld [vmem:[%s3 + $0x18] sm:$0xff]
      %v336 = vld [vmem:[%s3 + $0x20] sm:$0xff]
      %v337 = vld [vmem:[%s3 + $0x28] sm:$0xff]
      %v338 = vld [vmem:[%s3 + $0x30] sm:$0xff]
      %v339 = vld [vmem:[%s3 + $0x38] sm:$0xff]
      %341 = vset.pattern.permute.xlu0 0
      %342 = vperm.xlu0 %341, %v332
      %v343 = vpop.permute.xlu0 %342
      %346 = vset.pattern.permute.xlu0 0
      %347 = vperm.xlu0 %346, %v333
      %v348 = vpop.permute.xlu0 %347
      %351 = vset.pattern.permute.xlu0 0
      %352 = vperm.xlu0 %351, %v334
      %v353 = vpop.permute.xlu0 %352
      %356 = vset.pattern.permute.xlu0 0
      %357 = vperm.xlu0 %356, %v335
      %v358 = vpop.permute.xlu0 %357
      %361 = vset.pattern.permute.xlu0 0
      %362 = vperm.xlu0 %361, %v336
      %v363 = vpop.permute.xlu0 %362
      %366 = vset.pattern.permute.xlu0 0
      %367 = vperm.xlu0 %366, %v337
      %v368 = vpop.permute.xlu0 %367
      %371 = vset.pattern.permute.xlu0 0
      %372 = vperm.xlu0 %371, %v338
      %v373 = vpop.permute.xlu0 %372
      %376 = vset.pattern.permute.xlu0 0
      %377 = vperm.xlu0 %376, %v339
      %v378 = vpop.permute.xlu0 %377
      %v381 = vsel %vm229, %v324, 0
      %v384 = vsel %vm229, %v325, 0
      %v387 = vsel %vm229, %v326, 0
      %v390 = vsel %vm229, %v327, 0
      %v393 = vsel %vm229, %v328, 0
      %v396 = vsel %vm229, %v329, 0
      %v399 = vsel %vm229, %v330, 0
      %v402 = vsel %vm229, %v331, 0
      %404 = vmatprep.subr.mxu0 %v213
      %405 = vmatpush1.msra.mxu0 %v212
      %406 = vmatprep.subr.mxu0 %v215
      %407 = vmatpush1.msra.mxu0 %v214
      %408 = vmatprep.subr.mxu0 %v217
      %409 = vmatpush1.msra.mxu0 %v216
      %410 = vmatprep.subr.mxu0 %v219
      %411 = vmatpush1.msra.mxu0 %v218
      %412 = vmatprep.subr.mxu0 %v221
      %413 = vmatpush1.msra.mxu0 %v220
      %414 = vmatprep.subr.mxu0 %v223
      %415 = vmatpush1.msra.mxu0 %v222
      %416 = vmatprep.subr.mxu0 %v225
      %417 = vmatpush1.msra.mxu0 %v224
      %418 = vmatprep.subr.mxu0 %v227
      %419 = vmatpush1.msra.mxu0 %v226
      %420 = vmatprep.subr.mxu0 0.0
      %421 = vmatpush1.msra.mxu0 0.0
      %422 = vmatprep.subr.mxu0 0.0
      %423 = vmatpush1.msra.mxu0 0.0
      %424 = vmatprep.subr.mxu0 0.0
      %425 = vmatpush1.msra.mxu0 0.0
      %426 = vmatprep.subr.mxu0 0.0
      %427 = vmatpush1.msra.mxu0 0.0
      %428 = vmatprep.subr.mxu0 0.0
      %429 = vmatpush1.msra.mxu0 0.0
      %430 = vmatprep.subr.mxu0 0.0
      %431 = vmatpush1.msra.mxu0 0.0
      %432 = vmatprep.subr.mxu0 0.0
      %433 = vmatpush1.msra.mxu0 0.0
      %434 = vmatprep.subr.mxu0 0.0
      %435 = vmatpush1.msra.mxu0 0.0
      %436 = vmatprep.subr.mxu0 0.0
      %437 = vmatpush1.msra.mxu0 0.0
      %438 = vmatprep.subr.mxu0 0.0
      %439 = vmatpush1.msra.mxu0 0.0
      %440 = vmatprep.subr.mxu0 0.0
      %441 = vmatpush1.msra.mxu0 0.0
      %442 = vmatprep.subr.mxu0 0.0
      %443 = vmatpush1.msra.mxu0 0.0
      %444 = vmatprep.subr.mxu0 0.0
      %445 = vmatpush1.msra.mxu0 0.0
      %446 = vmatprep.subr.mxu0 0.0
      %447 = vmatpush1.msra.mxu0 0.0
      %448 = vmatprep.subr.mxu0 0.0
      %449 = vmatpush1.msra.mxu0 0.0
      %450 = vmatprep.subr.mxu0 0.0
      %451 = vmatpush1.msra.mxu0 0.0
      %452 = vmatprep.subr.mxu0 0.0
      %453 = vmatpush1.msra.mxu0 0.0
      %454 = vmatprep.subr.mxu0 0.0
      %455 = vmatpush1.msra.mxu0 0.0
      %456 = vmatprep.subr.mxu0 0.0
      %457 = vmatpush1.msra.mxu0 0.0
      %458 = vmatprep.subr.mxu0 0.0
      %459 = vmatpush1.msra.mxu0 0.0
      %460 = vmatprep.subr.mxu0 0.0
      %461 = vmatpush1.msra.mxu0 0.0
      %462 = vmatprep.subr.mxu0 0.0
      %463 = vmatpush1.msra.mxu0 0.0
      %464 = vmatprep.subr.mxu0 0.0
      %465 = vmatpush1.msra.mxu0 0.0
      %466 = vmatprep.subr.mxu0 0.0
      %467 = vmatpush1.msra.mxu0 0.0
      %468 = vmatprep.mubr.f32.mxu0 0.0
      %469 = vmatmul.mubr.f32.gmra.mrb[0].mxu0 %v381
      %v470 = vpop.f32.mrb[0].mxu0
      %v471 = vadd.f32 %v343, %v470
      %v472 = vpop.f32.mrb[0].mxu0
      %v473 = vadd.f32 %v343, %v472
      %474 = vmatprep.mubr.f32.mxu0 0.0
      %475 = vmatmul.mubr.f32.gmra.mrb[0].mxu0 %v384
      %v476 = vpop.f32.mrb[0].mxu0
      %v477 = vadd.f32 %v348, %v476
      %v478 = vpop.f32.mrb[0].mxu0
      %v479 = vadd.f32 %v348, %v478
      %480 = vmatprep.mubr.f32.mxu0 0.0
      %481 = vmatmul.mubr.f32.gmra.mrb[0].mxu0 %v387
      %v482 = vpop.f32.mrb[0].mxu0
      %v483 = vadd.f32 %v353, %v482
      %v484 = vpop.f32.mrb[0].mxu0
      %v485 = vadd.f32 %v353, %v484
      %486 = vmatprep.mubr.f32.mxu0 0.0
      %487 = vmatmul.mubr.f32.gmra.mrb[0].mxu0 %v390
      %v488 = vpop.f32.mrb[0].mxu0
      %v489 = vadd.f32 %v358, %v488
      %v490 = vpop.f32.mrb[0].mxu0
      %v491 = vadd.f32 %v358, %v490
      %492 = vmatprep.mubr.f32.mxu0 0.0
      %493 = vmatmul.mubr.f32.gmra.mrb[0].mxu0 %v393
      %v494 = vpop.f32.mrb[0].mxu0
      %v495 = vadd.f32 %v363, %v494
      %v496 = vpop.f32.mrb[0].mxu0
      %v497 = vadd.f32 %v363, %v496
      %498 = vmatprep.mubr.f32.mxu0 0.0
      %499 = vmatmul.mubr.f32.gmra.mrb[0].mxu0 %v396
      %v500 = vpop.f32.mrb[0].mxu0
      %v501 = vadd.f32 %v368, %v500
      %v502 = vpop.f32.mrb[0].mxu0
      %v503 = vadd.f32 %v368, %v502
      %504 = vmatprep.mubr.f32.mxu0 0.0
      %505 = vmatmul.mubr.f32.gmra.mrb[0].mxu0 %v399
      %v506 = vpop.f32.mrb[0].mxu0
      %v507 = vadd.f32 %v373, %v506
      %v508 = vpop.f32.mrb[0].mxu0
      %v509 = vadd.f32 %v373, %v508
      %510 = vmatprep.mubr.f32.mxu0 0.0
      %511 = vmatmul.mubr.f32.gmra.mrb[0].mxu0 %v402
      %v512 = vpop.f32.mrb[0].mxu0
      %v513 = vadd.f32 %v378, %v512
      %v514 = vpop.f32.mrb[0].mxu0
      %v515 = vadd.f32 %v378, %v514
      %516 = vdwg.mxu0
      %v517 = vlaneseq
      %v518 = vshrl.u32 %v517, 7
      %v519 = vsub.s32 0, %v518
      %v520 = vrot.slane %v322, %v519
      %v521 = vlaneseq
      %v522 = vshrl.u32 %v521, 7
      %v523 = vsub.s32 0, %v522
      %v524 = vrot.slane %v323, %v523
      %v525 = vmul.f32 %v471, %v520
      %v526 = vmul.f32 %v473, %v524
      %v527 = vmul.f32 %v477, %v520
      %v528 = vmul.f32 %v479, %v524
      %v529 = vmul.f32 %v483, %v520
      %v530 = vmul.f32 %v485, %v524
      %v531 = vmul.f32 %v489, %v520
      %v532 = vmul.f32 %v491, %v524
      %v533 = vmul.f32 %v495, %v520
      %v534 = vmul.f32 %v497, %v524
      %v535 = vmul.f32 %v501, %v520
      %v536 = vmul.f32 %v503, %v524
      %v537 = vmul.f32 %v507, %v520
      %v538 = vmul.f32 %v509, %v524
      %v539 = vmul.f32 %v513, %v520
      %v540 = vmul.f32 %v515, %v524
      %v541 = vadd.f32 %v525, %v212
      %v542 = vadd.f32 %v526, %v213
      %v543 = vadd.f32 %v527, %v214
      %v544 = vadd.f32 %v528, %v215
      %v545 = vadd.f32 %v529, %v216
      %v546 = vadd.f32 %v530, %v217
      %v547 = vadd.f32 %v531, %v218
      %v548 = vadd.f32 %v532, %v219
      %v549 = vadd.f32 %v533, %v220
      %v550 = vadd.f32 %v534, %v221
      %v551 = vadd.f32 %v535, %v222
      %v552 = vadd.f32 %v536, %v223
      %v553 = vadd.f32 %v537, %v224
      %v554 = vadd.f32 %v538, %v225
      %v555 = vadd.f32 %v539, %v226
      %v556 = vadd.f32 %v540, %v227
      %557 = vst [vmem:[%s211] sm:$0xff] %v541
      %558 = vst [vmem:[%s211 + $0x8] sm:$0xff] %v542
      %559 = vst [vmem:[%s211 + $0x10] sm:$0xff] %v543
      %560 = vst [vmem:[%s211 + $0x18] sm:$0xff] %v544
      %561 = vst [vmem:[%s211 + $0x20] sm:$0xff] %v545
      %562 = vst [vmem:[%s211 + $0x28] sm:$0xff] %v546
      %563 = vst [vmem:[%s211 + $0x30] sm:$0xff] %v547
      %564 = vst [vmem:[%s211 + $0x38] sm:$0xff] %v548
      %565 = vst [vmem:[%s211 + $0x40] sm:$0xff] %v549
      %566 = vst [vmem:[%s211 + $0x48] sm:$0xff] %v550
      %567 = vst [vmem:[%s211 + $0x50] sm:$0xff] %v551
      %568 = vst [vmem:[%s211 + $0x58] sm:$0xff] %v552
      %569 = vst [vmem:[%s211 + $0x60] sm:$0xff] %v553
      %570 = vst [vmem:[%s211 + $0x68] sm:$0xff] %v554
      %571 = vst [vmem:[%s211 + $0x70] sm:$0xff] %v555
      %572 = vst [vmem:[%s211 + $0x78] sm:$0xff] %v556
      %p573 = scmp.lt.s32.totalorder %s15, 1
      %s574 = scalar_select %p573, %s15, 1
      %s575 = smul.addr %s574, 16
      %s576 = smul.addr %s575, 8
      %s577 = scalar_lea.vmem %s4, %s576
      // Predicated region
      $region37: #{la_conv.1} parent=35 // pred_check
        %p578 = pneg %p127
      $region38: #{la_conv.1} parent=35 // pred_check_branch
        %580 = sbr.rel (%p578) target = $region40
      $region39: #{la_conv.1} parent=35 // pred_region
        _
      $region40: #{la_conv.1} parent=35 // pred_fallthru
        _
    $region36: #{la_conv.1} parent=5 // pred_fallthru
      _
    %p581 = scmp.le.s32.totalorder 2, %s10
    // Predicated region
    $region41: #{la_conv.1} parent=5 // pred_check
      %p582 = pneg %p581
    $region42: #{la_conv.1} parent=5 // pred_check_branch
      %584 = sbr.rel (%p582) target = $region44
    $region43: #{la_conv.1} parent=5 // pred_region
      %s585 = ssub.s32 %s10, 2
      // Predicated region
      $region45: #{la_conv.1} parent=43 // pred_check
        %p586 = pneg %p133
      $region46: #{la_conv.1} parent=43 // pred_check_branch
        %588 = sbr.rel (%p586) target = $region48
      $region47: #{la_conv.1} parent=43 // pred_region
        %p589 = scmp.lt.s32.totalorder %s16, 1
        %s590 = scalar_select %p589, %s16, 1
        %s591 = smul.addr %s590, 16
        %s592 = smul.addr %s591, 8
        %s593 = scalar_lea.vmem %s4, %s592
      $region48: #{la_conv.1} parent=43 // pred_fallthru
        _
    $region44: #{la_conv.1} parent=5 // pred_fallthru
      _
  $region6: #{la_conv.1} parent=0 // loop_footer
    %s14 = sadd.s32 1, %s10
  $region7: #{la_conv.1} parent=0 // loop_footer_branch
    %9 = sbr.rel target = $region3
  $region8: #{la_conv.1} parent=0 // loop_exit
    _

</llo_original>
